<compile_context>
chip_gen: v6e
topology: v6e:2x2x1
jax: 0.10.0
libtpu: 0.0.40
codegen_flags: <defaults>
</compile_context>

<pallas_src>
import functools

import jax
import jax.numpy as jnp
from jax.experimental import pallas as pl
from jax.experimental.pallas import tpu as pltpu

HIDDEN = 128        # fc1 output width (fixed by the module)
HEAD_PAD = 128      # fused head output lanes (lane-dense)
NEG_BIG = -1e30     # finite softmax mask sentinel (avoids -inf arithmetic hazards)
MAX_TILE_ROWS = 128 # batch rows per grid step (safe for v7x 64 MiB VMEM, lane-dense)


def actor_critic_kernel(x_ref, w1_ref, wh_ref, bh_ref, out_ref, *, num_action):
    # x has the bias column (constant 1.0) appended -> fc1 bias rides in the GEMM.
    x = x_ref[...]                                                      # (tb, S+1)

    h = jnp.dot(x, w1_ref[...], preferred_element_type=jnp.float32)    # fc1 (+b1)
    h = jnp.maximum(h, 0.0)                                             # ReLU, (tb, 128)

    # Fused head GEMM: lanes [0:A] = action logits, lane A = value,
    # lanes > A already masked to -1e30 via the fused bias.
    head = jnp.dot(h, wh_ref[...], preferred_element_type=jnp.float32) + bh_ref[...]

    col = jax.lax.broadcasted_iota(jnp.int32, head.shape, 1)            # (tb, 128)
    is_value = col == num_action

    # Softmax over action lanes: only the value lane needs explicit masking.
    logits = jnp.where(is_value, NEG_BIG, head)
    m = jnp.max(logits, axis=-1, keepdims=True)
    e = jnp.exp(logits - m)                                             # pad/value lanes -> 0
    denom = jnp.sum(e, axis=-1, keepdims=True)
    probs = e * pl.reciprocal(denom)                                    # exact (approx=False)

    # Lane-dense output slab: [probs (A lanes) | value (lane A) | zeros].
    out_ref[...] = jnp.where(is_value, head, probs)


def fuse_params(w1, b1, wa, ba, wv, bv):
    """Fold b1 into W1 (extra row) and fuse actor/critic heads into one padded GEMM.

    Returns (w1_aug (S+1,128), wh (128,128), bh (1,128)); bh lanes > num_action hold
    the softmax pad mask (-1e30). Hoist this out of the per-step path.
    """
    hid, a = wa.shape
    assert a <= HEAD_PAD - 1, "num_action must be <= HEAD_PAD - 1 (value occupies lane A)"
    w1_aug = jnp.concatenate([w1.astype(jnp.float32), b1.astype(jnp.float32)], axis=0)
    wh = jnp.zeros((hid, HEAD_PAD), jnp.float32)
    wh = wh.at[:, :a].set(wa).at[:, a].set(wv[:, 0])
    bh = jnp.full((1, HEAD_PAD), NEG_BIG, jnp.float32)
    bh = bh.at[0, :a].set(ba[0]).at[0, a].set(bv[0, 0])
    return w1_aug, wh, bh


def make_forward(num_action):
    a = num_action
    kernel = functools.partial(actor_critic_kernel, num_action=a)

    @jax.jit
    def forward(x, w1_aug, wh, bh):
        batch, s = x.shape
        s_aug = s + 1

        # Fold fc1 bias into the GEMM via a constant-1 column.
        x_aug = jnp.concatenate([x, jnp.ones((batch, 1), x.dtype)], axis=1)

        # Batch tiling: sublane-aligned, capped for v7x VMEM; pad rows with zeros
        # (padded rows are harmless: h=0, logits=bias, sliced off below).
        tb = min(MAX_TILE_ROWS, -(-batch // 8) * 8)
        n_tiles = pl.cdiv(batch, tb)
        batch_pad = n_tiles * tb
        if batch_pad != batch:
            x_aug = jnp.pad(x_aug, ((0, batch_pad - batch), (0, 0)))

        cost = pl.CostEstimate(
            flops=2 * batch_pad * s_aug * HIDDEN + 2 * batch_pad * HIDDEN * HEAD_PAD,
            transcendentals=batch_pad * HEAD_PAD,
            bytes_accessed=4 * (batch_pad * s_aug + s_aug * HIDDEN
                                + HIDDEN * HEAD_PAD + HEAD_PAD + batch_pad * HEAD_PAD),
        )

        out = pl.pallas_call(
            kernel,
            out_shape=jax.ShapeDtypeStruct((batch_pad, HEAD_PAD), jnp.float32),
            grid=(n_tiles,),
            in_specs=[
                pl.BlockSpec((tb, s_aug), lambda i: (i, 0)),          # x: streamed per tile
                pl.BlockSpec((s_aug, HIDDEN), lambda i: (0, 0)),      # W1(+b1): VMEM-resident
                pl.BlockSpec((HIDDEN, HEAD_PAD), lambda i: (0, 0)),   # fused head W: resident
                pl.BlockSpec((1, HEAD_PAD), lambda i: (0, 0)),        # fused head b: resident
            ],
            out_specs=pl.BlockSpec((tb, HEAD_PAD), lambda i: (i, 0)),
            compiler_params=pltpu.CompilerParams(
                dimension_semantics=("parallel",)),                    # both TCs on v7x
            cost_estimate=cost,
        )(x_aug, w1_aug, wh, bh)

        probs = out[:batch, :a]
        value = out[:batch, a:a + 1]
        return probs, value

    return forward


def init_linear(key, fan_in, fan_out):
    # PyTorch nn.Linear default init: U(-1/sqrt(fan_in), 1/sqrt(fan_in))
    kw, kb = jax.random.split(key)
    bound = 1.0 / (fan_in ** 0.5)
    w = jax.random.uniform(kw, (fan_in, fan_out), jnp.float32, -bound, bound)
    b = jax.random.uniform(kb, (1, fan_out), jnp.float32, -bound, bound)
    return w, b


def reference_forward(x, w1, b1, wa, ba, wv, bv):
    h = jnp.maximum(x @ w1 + b1, 0.0)
    probs = jax.nn.softmax(h @ wa + ba, axis=-1)
    value = h @ wv + bv
    return probs, value


if __name__ == "__main__":
    # Small, MountainCar-like sizes.
    num_state = 4
    num_action = 4

    key = jax.random.PRNGKey(0)
    kx_small, kx_big, k1, k2, k3 = jax.random.split(key, 5)

    w1, b1 = init_linear(k1, num_state, HIDDEN)
    wa, ba = init_linear(k2, HIDDEN, num_action)
    wv, bv = init_linear(k3, HIDDEN, 1)

    # Hoisted out of the per-step path: fold b1 and fuse the two heads.
    w1_aug, wh, bh = fuse_params(w1, b1, wa, ba, wv, bv)
    forward = make_forward(num_action)

    # (acting-sized batch, single tile) and (replay-sized batch, multi-tile grid + row padding)
    for batch, kk in ((8, kx_small), (300, kx_big)):
        x = jax.random.normal(kk, (batch, num_state), jnp.float32)
        probs, value = forward(x, w1_aug, wh, bh)
        jax.block_until_ready((probs, value))

        ref_probs, ref_value = reference_forward(x, w1, b1, wa, ba, wv, bv)
        assert probs.shape == (batch, num_action)
        assert value.shape == (batch, 1)
        assert jnp.allclose(probs, ref_probs, atol=1e-5, rtol=1e-5)
        assert jnp.allclose(value, ref_value, atol=1e-5, rtol=1e-5)
        assert jnp.allclose(jnp.sum(probs, axis=-1), 1.0, atol=1e-5)

    print("KERNEL_OK")
</pallas_src>

<mosaic_0001>
module attributes {stable_mosaic.version = 11 : i64} {
  func.func @actor_critic_kernel(%arg0: i32, %arg1: memref<8x5xf32, #tpu.memory_space<vmem>>, %arg2: memref<5x128xf32, #tpu.memory_space<vmem>>, %arg3: memref<128x128xf32, #tpu.memory_space<vmem>>, %arg4: memref<1x128xf32, #tpu.memory_space<vmem>>, %arg5: memref<8x128xf32, #tpu.memory_space<vmem>>) attributes {dimension_semantics = [#tpu.dimension_semantics<parallel>], iteration_bounds = array<i64: 1>, scalar_prefetch = 0 : i64, scratch_operands = 0 : i64, tpu.core_type = #tpu.core_type<tc>, window_params = [{transform_indices = @transform_0, window_bounds = array<i64: 8, 5>}, {pipeline_mode = #tpu.pipeline_mode<synchronous>, transform_indices = @transform_1, window_bounds = array<i64: 5, 128>}, {pipeline_mode = #tpu.pipeline_mode<synchronous>, transform_indices = @transform_2, window_bounds = array<i64: 128, 128>}, {pipeline_mode = #tpu.pipeline_mode<synchronous>, transform_indices = @transform_3, window_bounds = array<i64: 1, 128>}, {transform_indices = @transform_4, window_bounds = array<i64: 8, 128>}]} {
    %c0 = arith.constant 0 : index
    %c0_0 = arith.constant 0 : index
    %0 = vector.load %arg1[%c0, %c0_0] : memref<8x5xf32, #tpu.memory_space<vmem>>, vector<8x5xf32>
    %c0_1 = arith.constant 0 : index
    %c0_2 = arith.constant 0 : index
    %1 = vector.load %arg2[%c0_1, %c0_2] : memref<5x128xf32, #tpu.memory_space<vmem>>, vector<5x128xf32>
    %cst = arith.constant dense<0.000000e+00> : vector<8x128xf32>
    %2 = tpu.matmul %0, %1, %cst {dimension_numbers = #tpu.dot_dimension_numbers<[1], [0], [0], [1], [0, 0, 1, 1], [], []>} : vector<8x5xf32>, vector<5x128xf32>, vector<8x128xf32> -> vector<8x128xf32>
    %cst_3 = arith.constant 0.000000e+00 : f32
    %3 = vector.broadcast %cst_3 : f32 to vector<8x128xf32>
    %4 = arith.maximumf %2, %3 : vector<8x128xf32>
    %c0_4 = arith.constant 0 : index
    %c0_5 = arith.constant 0 : index
    %5 = vector.load %arg3[%c0_4, %c0_5] : memref<128x128xf32, #tpu.memory_space<vmem>>, vector<128x128xf32>
    %cst_6 = arith.constant dense<0.000000e+00> : vector<8x128xf32>
    %6 = tpu.matmul %4, %5, %cst_6 {dimension_numbers = #tpu.dot_dimension_numbers<[1], [0], [0], [1], [0, 0, 1, 1], [], []>} : vector<8x128xf32>, vector<128x128xf32>, vector<8x128xf32> -> vector<8x128xf32>
    %c0_7 = arith.constant 0 : index
    %c0_8 = arith.constant 0 : index
    %7 = vector.load %arg4[%c0_7, %c0_8] : memref<1x128xf32, #tpu.memory_space<vmem>>, vector<1x128xf32>
    %8 = vector.broadcast %7 : vector<1x128xf32> to vector<8x128xf32>
    %9 = arith.addf %6, %8 : vector<8x128xf32>
    %10 = tpu.iota {dimensions = array<i32: 1>} : vector<8x128xi32>
    %c4_i32 = arith.constant 4 : i32
    %11 = vector.broadcast %c4_i32 : i32 to vector<8x128xi32>
    %12 = arith.cmpi eq, %10, %11 : vector<8x128xi32>
    %cst_9 = arith.constant -1.000000e+30 : f32
    %13 = vector.broadcast %cst_9 : f32 to vector<8x128xf32>
    %14 = arith.select %12, %13, %9 : vector<8x128xi1>, vector<8x128xf32>
    %cst_10 = arith.constant dense<0xFF800000> : vector<8xf32>
    %15 = vector.multi_reduction <maximumf>, %14, %cst_10 [1] : vector<8x128xf32> to vector<8xf32>
    %16 = vector.shape_cast %15 : vector<8xf32> to vector<8x1xf32>
    %17 = vector.broadcast %16 : vector<8x1xf32> to vector<8x128xf32>
    %18 = arith.subf %14, %17 : vector<8x128xf32>
    %19 = math.exp %18 : vector<8x128xf32>
    %cst_11 = arith.constant dense<0.000000e+00> : vector<8xf32>
    %20 = vector.multi_reduction <add>, %19, %cst_11 [1] : vector<8x128xf32> to vector<8xf32>
    %21 = vector.shape_cast %20 : vector<8xf32> to vector<8x1xf32>
    %22 = tpu.reciprocal %21 : vector<8x1xf32> -> vector<8x1xf32>
    %23 = vector.broadcast %22 : vector<8x1xf32> to vector<8x128xf32>
    %24 = arith.mulf %19, %23 : vector<8x128xf32>
    %25 = arith.select %12, %9, %24 : vector<8x128xi1>, vector<8x128xf32>
    %c0_12 = arith.constant 0 : index
    %c0_13 = arith.constant 0 : index
    %26 = vector.load %arg5[%c0_12, %c0_13] : memref<8x128xf32, #tpu.memory_space<vmem>>, vector<8x128xf32>
    tpu.vector_store %arg5[%c0_12, %c0_13], %25 {strides = array<i32>} : memref<8x128xf32, #tpu.memory_space<vmem>>, vector<8x128xf32>,
    return
  }
  func.func @transform_0(%arg0: i32) -> (i32, i32) {
    %c0_i32 = arith.constant 0 : i32
    %c0_i32_0 = arith.constant 0 : i32
    return %arg0, %c0_i32 : i32, i32
  }
  func.func @transform_1(%arg0: i32) -> (i32, i32) {
    %c0_i32 = arith.constant 0 : i32
    %c0_i32_0 = arith.constant 0 : i32
    %c0_i32_1 = arith.constant 0 : i32
    return %c0_i32, %c0_i32_0 : i32, i32
  }
  func.func @transform_2(%arg0: i32) -> (i32, i32) {
    %c0_i32 = arith.constant 0 : i32
    %c0_i32_0 = arith.constant 0 : i32
    %c0_i32_1 = arith.constant 0 : i32
    return %c0_i32, %c0_i32_0 : i32, i32
  }
  func.func @transform_3(%arg0: i32) -> (i32, i32) {
    %c0_i32 = arith.constant 0 : i32
    %c0_i32_0 = arith.constant 0 : i32
    %c0_i32_1 = arith.constant 0 : i32
    return %c0_i32, %c0_i32_0 : i32, i32
  }
  func.func @transform_4(%arg0: i32) -> (i32, i32) {
    %c0_i32 = arith.constant 0 : i32
    %c0_i32_0 = arith.constant 0 : i32
    return %arg0, %c0_i32 : i32, i32
  }
}

</mosaic_0001>

<llo_original>
// kernel: forward.1
$region0: #{forward.1}
  #allocation0 [shape = 'u32[]', space=smem, size = 0x4, offset = 0x4, fixed_abs, tag = 'smem constant byte address 0x4 - core index']
  #allocation1 [shape = 'u32[144,128]{1,0:T(1,128)}', space=vmem, size = 0x12000, scoped, tag = 'internal scratch']
  %s0 = inlined_call_operand.vmem [shape: f32[8,5], index: 0, kind: input, shape index: {}]
  %s1 = inlined_call_operand.vmem [shape: f32[5,128], index: 1, kind: input, shape index: {}]
  %s2 = inlined_call_operand.hbm [shape: f32[128,128], index: 2, kind: input, shape index: {}]
  %s3 = inlined_call_operand.vmem [shape: f32[1,128], index: 3, kind: input, shape index: {}]
  %s4 = inlined_call_operand.vmem [shape: f32[8,128], index: 4, kind: output, shape index: {}]
  %s5 = sld [smem:[#allocation0]]
  $region30: #{forward.1} parent=0
    _
  %s7 = ssub.s32 1, %s5
  %s8 = scalar_select 0, %s7, %s5
  $region1: #{forward.1} parent=0
    #allocation2 [shape = 'u8[65536]{0}', space=vmem, size = 0x10000, scoped, tag = 'input window, operand 2, single buffered']
    #allocation3 [shape = 's32[1]{0}', space=sflag, size = 0x4, scoped, tag = 'scoped memory for forward.1']
    %9 = vsyncpa [#allocation3], 0
    // Predicated region
    $region2: #{forward.1} parent=1 // pred_check
      _
    $region3: #{forward.1} parent=1 // pred_check_branch
      %11 = sbr.rel (0) target = $region5
    $region4: #{forward.1} parent=1 // pred_region
      _
    $region5: #{forward.1} parent=1 // pred_fallthru
      _
    // Predicated region
    $region6: #{forward.1} parent=1 // pred_check
      _
    $region7: #{forward.1} parent=1 // pred_check_branch
      %13 = sbr.rel (0) target = $region9
    $region8: #{forward.1} parent=1 // pred_region
      _
    $region9: #{forward.1} parent=1 // pred_fallthru
      _
    // Predicated region
    $region10: #{forward.1} parent=1 // pred_check
      _
    $region11: #{forward.1} parent=1 // pred_check_branch
      %15 = sbr.rel (0) target = $region13
    $region12: #{forward.1} parent=1 // pred_region
      %s17 = ssub.s32 2048, 2048
      %18 = vsyncadd [#allocation3], %s17
      %s19 = sshll.u32 [#allocation2], 4
      %s20 = int_to_ptr.vmem [resolvable:$true] %s19
      %25 = dma.hbm_to_vmem [thread:$0]  %s2, 2048, %s20, [#allocation3], 128, 128, 8
    $region13: #{forward.1} parent=1 // pred_fallthru
      _
    // Predicated region
    $region14: #{forward.1} parent=1 // pred_check
      _
    $region15: #{forward.1} parent=1 // pred_check_branch
      %27 = sbr.rel (0) target = $region17
    $region16: #{forward.1} parent=1 // pred_region
      _
    $region17: #{forward.1} parent=1 // pred_fallthru
      _
    // Predicated region
    $region18: #{forward.1} parent=1 // pred_check
      _
    $region19: #{forward.1} parent=1 // pred_check_branch
      %29 = sbr.rel (0) target = $region21
    $region20: #{forward.1} parent=1 // pred_region
      %30 = dma.done [#allocation3], 2048
    $region21: #{forward.1} parent=1 // pred_fallthru
      _
    %v31 = vld [vmem:[%s0] sm:$0xff]
    %v32 = vld [vmem:[%s1] sm:$0x1f]
    %vm33 = vcmask 39936
    %v35 = vsel %vm33, %v31, 0
    %vm37 = vcmask 1044480
    %v39 = vsel %vm37, %v32, 0
    %41 = vmatprep.subr.mxu0 0.0
    %42 = vmatpush1.msra.mxu0 0.0
    %43 = vmatprep.subr.mxu0 0.0
    %44 = vmatpush1.msra.mxu0 0.0
    %45 = vmatprep.subr.mxu0 0.0
    %46 = vmatpush1.msra.mxu0 0.0
    %47 = vmatprep.subr.mxu0 0.0
    %48 = vmatpush1.msra.mxu0 0.0
    %49 = vmatprep.subr.mxu0 0.0
    %50 = vmatpush1.msra.mxu0 0.0
    %51 = vmatprep.subr.mxu0 0.0
    %52 = vmatpush1.msra.mxu0 0.0
    %53 = vmatprep.subr.mxu0 0.0
    %54 = vmatpush1.msra.mxu0 0.0
    %55 = vmatprep.subr.mxu0 0.0
    %56 = vmatpush1.msra.mxu0 0.0
    %57 = vmatprep.subr.mxu0 0.0
    %58 = vmatpush1.msra.mxu0 0.0
    %59 = vmatprep.subr.mxu0 0.0
    %60 = vmatpush1.msra.mxu0 0.0
    %61 = vmatprep.subr.mxu0 0.0
    %62 = vmatpush1.msra.mxu0 0.0
    %63 = vmatprep.subr.mxu0 0.0
    %64 = vmatpush1.msra.mxu0 0.0
    %65 = vmatprep.subr.mxu0 0.0
    %66 = vmatpush1.msra.mxu0 0.0
    %67 = vmatprep.subr.mxu0 0.0
    %68 = vmatpush1.msra.mxu0 0.0
    %69 = vmatprep.subr.mxu0 0.0
    %70 = vmatpush1.msra.mxu0 0.0
    %71 = vmatprep.subr.mxu0 0.0
    %72 = vmatpush1.msra.mxu0 %v39
    %73 = vmatprep.subr.mxu0 0.0
    %74 = vmatpush2.msra.mxu0 0.0
    %75 = vmatprep.subr.mxu0 0.0
    %76 = vmatpush2.msra.mxu0 0.0
    %77 = vmatprep.subr.mxu0 0.0
    %78 = vmatpush2.msra.mxu0 0.0
    %79 = vmatprep.subr.mxu0 0.0
    %80 = vmatpush2.msra.mxu0 0.0
    %81 = vmatprep.subr.mxu0 0.0
    %82 = vmatpush2.msra.mxu0 0.0
    %83 = vmatprep.subr.mxu0 0.0
    %84 = vmatpush2.msra.mxu0 0.0
    %85 = vmatprep.subr.mxu0 0.0
    %86 = vmatpush2.msra.mxu0 0.0
    %87 = vmatprep.subr.mxu0 0.0
    %88 = vmatpush2.msra.mxu0 0.0
    %89 = vmatprep.subr.mxu0 0.0
    %90 = vmatpush2.msra.mxu0 0.0
    %91 = vmatprep.subr.mxu0 0.0
    %92 = vmatpush2.msra.mxu0 0.0
    %93 = vmatprep.subr.mxu0 0.0
    %94 = vmatpush2.msra.mxu0 0.0
    %95 = vmatprep.subr.mxu0 0.0
    %96 = vmatpush2.msra.mxu0 0.0
    %97 = vmatprep.subr.mxu0 0.0
    %98 = vmatpush2.msra.mxu0 0.0
    %99 = vmatprep.subr.mxu0 0.0
    %100 = vmatpush2.msra.mxu0 0.0
    %101 = vmatprep.subr.mxu0 0.0
    %102 = vmatpush2.msra.mxu0 0.0
    %103 = vmatprep.subr.mxu0 0.0
    %104 = vmatpush2.msra.mxu0 0.0
    %105 = vmatprep.mubr.f32.mxu0 0.0
    %106 = vmatmul.mubr.f32.gmra.mxu0 %v35
    %v107 = vpop.f32.mrf.mxu0
    %v108 = vadd.f32 0.0, %v107
    %v109 = vpop.f32.mrf.mxu0
    %110 = vdwg.mxu0
    %v111 = vmax.f32 %v108, 0.0
    %v112 = vld [vmem:[#allocation2] sm:$0xff]
    %v113 = vld [vmem:[#allocation2 + $0x8] sm:$0xff]
    %v114 = vld [vmem:[#allocation2 + $0x10] sm:$0xff]
    %v115 = vld [vmem:[#allocation2 + $0x18] sm:$0xff]
    %v116 = vld [vmem:[#allocation2 + $0x20] sm:$0xff]
    %v117 = vld [vmem:[#allocation2 + $0x28] sm:$0xff]
    %v118 = vld [vmem:[#allocation2 + $0x30] sm:$0xff]
    %v119 = vld [vmem:[#allocation2 + $0x38] sm:$0xff]
    %v120 = vld [vmem:[#allocation2 + $0x40] sm:$0xff]
    %v121 = vld [vmem:[#allocation2 + $0x48] sm:$0xff]
    %v122 = vld [vmem:[#allocation2 + $0x50] sm:$0xff]
    %v123 = vld [vmem:[#allocation2 + $0x58] sm:$0xff]
    %v124 = vld [vmem:[#allocation2 + $0x60] sm:$0xff]
    %v125 = vld [vmem:[#allocation2 + $0x68] sm:$0xff]
    %v126 = vld [vmem:[#allocation2 + $0x70] sm:$0xff]
    %v127 = vld [vmem:[#allocation2 + $0x78] sm:$0xff]
    %v128 = vld [vmem:[%s3] sm:$0x1]
    %v130 = vlaneseq
    %v131 = vshrl.u32 %v130, 7
    %v132 = vsub.s32 0, %v131
    %v133 = vrot.slane %v128, %v132
    %135 = vmatprep.subr.mxu0 0.0
    %136 = vmatpush1.msra.mxu0 %v127
    %137 = vmatprep.subr.mxu0 0.0
    %138 = vmatpush1.msra.mxu0 %v126
    %139 = vmatprep.subr.mxu0 0.0
    %140 = vmatpush1.msra.mxu0 %v125
    %141 = vmatprep.subr.mxu0 0.0
    %142 = vmatpush1.msra.mxu0 %v124
    %143 = vmatprep.subr.mxu0 0.0
    %144 = vmatpush1.msra.mxu0 %v123
    %145 = vmatprep.subr.mxu0 0.0
    %146 = vmatpush1.msra.mxu0 %v122
    %147 = vmatprep.subr.mxu0 0.0
    %148 = vmatpush1.msra.mxu0 %v121
    %149 = vmatprep.subr.mxu0 0.0
    %150 = vmatpush1.msra.mxu0 %v120
    %151 = vmatprep.subr.mxu0 0.0
    %152 = vmatpush1.msra.mxu0 %v119
    %153 = vmatprep.subr.mxu0 0.0
    %154 = vmatpush1.msra.mxu0 %v118
    %155 = vmatprep.subr.mxu0 0.0
    %156 = vmatpush1.msra.mxu0 %v117
    %157 = vmatprep.subr.mxu0 0.0
    %158 = vmatpush1.msra.mxu0 %v116
    %159 = vmatprep.subr.mxu0 0.0
    %160 = vmatpush1.msra.mxu0 %v115
    %161 = vmatprep.subr.mxu0 0.0
    %162 = vmatpush1.msra.mxu0 %v114
    %163 = vmatprep.subr.mxu0 0.0
    %164 = vmatpush1.msra.mxu0 %v113
    %165 = vmatprep.subr.mxu0 0.0
    %166 = vmatpush1.msra.mxu0 %v112
    %167 = vmatprep.subr.mxu0 0.0
    %168 = vmatpush2.msra.mxu0 0.0
    %169 = vmatprep.subr.mxu0 0.0
    %170 = vmatpush2.msra.mxu0 0.0
    %171 = vmatprep.subr.mxu0 0.0
    %172 = vmatpush2.msra.mxu0 0.0
    %173 = vmatprep.subr.mxu0 0.0
    %174 = vmatpush2.msra.mxu0 0.0
    %175 = vmatprep.subr.mxu0 0.0
    %176 = vmatpush2.msra.mxu0 0.0
    %177 = vmatprep.subr.mxu0 0.0
    %178 = vmatpush2.msra.mxu0 0.0
    %179 = vmatprep.subr.mxu0 0.0
    %180 = vmatpush2.msra.mxu0 0.0
    %181 = vmatprep.subr.mxu0 0.0
    %182 = vmatpush2.msra.mxu0 0.0
    %183 = vmatprep.subr.mxu0 0.0
    %184 = vmatpush2.msra.mxu0 0.0
    %185 = vmatprep.subr.mxu0 0.0
    %186 = vmatpush2.msra.mxu0 0.0
    %187 = vmatprep.subr.mxu0 0.0
    %188 = vmatpush2.msra.mxu0 0.0
    %189 = vmatprep.subr.mxu0 0.0
    %190 = vmatpush2.msra.mxu0 0.0
    %191 = vmatprep.subr.mxu0 0.0
    %192 = vmatpush2.msra.mxu0 0.0
    %193 = vmatprep.subr.mxu0 0.0
    %194 = vmatpush2.msra.mxu0 0.0
    %195 = vmatprep.subr.mxu0 0.0
    %196 = vmatpush2.msra.mxu0 0.0
    %197 = vmatprep.subr.mxu0 0.0
    %198 = vmatpush2.msra.mxu0 0.0
    %199 = vmatprep.mubr.f32.mxu0 0.0
    %200 = vmatmul.mubr.f32.gmra.mxu0 %v111
    %v201 = vpop.f32.mrf.mxu0
    %v202 = vadd.f32 %v133, %v201
    %v203 = vpop.f32.mrf.mxu0
    %204 = vdwg.mxu0
    %v205 = vlaneseq
    %v206 = vand.u32 %v205, 127
    %vm207 = vcmp.eq.s32.totalorder %v206, 4
    %v208 = vsel %vm207, -1e+30, %v202
    %209 = vmax.xlane.f32.xlu0 %v208
    %v210 = vpop.xlane.xlu0 %209
    %v211 = vsub.f32 %v208, %v210
    %v212 = vmul.f32 %v211, 1.442695
    %v213 = vpow.pop %v212
    %214 = vadd.xlane.f32.xlu0 %v213
    %v215 = vpop.xlane.xlu0 %214
    %v216 = vrcp.pop %v215
    %v217 = vmul.f32 %v213, %v216
    %v218 = vsel %vm207, %v202, %v217
    %219 = vst [vmem:[%s4] sm:$0xff] %v218
    // Predicated region
    $region22: #{forward.1} parent=1 // pred_check
      _
    $region23: #{forward.1} parent=1 // pred_check_branch
      %221 = sbr.rel (0) target = $region25
    $region24: #{forward.1} parent=1 // pred_region
      _
    $region25: #{forward.1} parent=1 // pred_fallthru
      _
    // Predicated region
    $region26: #{forward.1} parent=1 // pred_check
      _
    $region27: #{forward.1} parent=1 // pred_check_branch
      %223 = sbr.rel (0) target = $region29
    $region28: #{forward.1} parent=1 // pred_region
      _
    $region29: #{forward.1} parent=1 // pred_fallthru
      _
    %224 = vsyncpa [#allocation3], 1

</llo_original>
